<compile_context>
chip_gen: v7x
topology: tpu7x:2x2x1
jax: 0.10.0
libtpu: 0.0.40
codegen_flags: <defaults>
</compile_context>

<pallas_src>
import functools
import math

import jax
import jax.numpy as jnp
from jax.experimental import pallas as pl
from jax.experimental.pallas import tpu as pltpu


def _attn_kernel(kv_ref, ws_ref, bs_ref, wvt_ref, bv_ref, mexp_ref,
                 wot_ref, bo_ref, gsum_ref, gbcast_ref, out_ref,
                 *, seq_len, batch):
    """One grid step processes every (t, b) row at once.

    kv_ref     : (R, E)  key_value rows, t-major (row r = t*B + b), R = T*B
    ws_ref     : (E, H)  fused score projection  Wk^T @ Qsel  (scaled query folded in)
    bs_ref     : (1, H)  fused score bias        bk @ Qsel
    wvt_ref    : (E, E)  Wv^T                    bv_ref : (1, E)
    mexp_ref   : (H, E)  one-hot head -> lane expansion matrix
    wot_ref    : (E, E)  Wo^T                    bo_ref : (1, E)
    gsum_ref   : (B, R)  0/1 segment-sum matrix (sum over the T rows of each batch)
    gbcast_ref : (R, B)  its transpose (broadcast per-batch stats back to rows)
    out_ref    : (B, E)  one output vector per batch (identical for every t)
    """
    x = kv_ref[...].astype(jnp.float32)                                    # (R, E)

    # Fused per-head scores: s[r, h] = scale * q_h . (x[r] @ Wk^T + bk)_h
    s = jnp.dot(x, ws_ref[...], preferred_element_type=jnp.float32) + bs_ref[...]   # (R, H)
    # Value projection.
    v = jnp.dot(x, wvt_ref[...], preferred_element_type=jnp.float32) + bv_ref[...]  # (R, E)

    # Per-(batch, head) max over the T key positions. Rows of batch b sit at
    # r = t*B + b, so each step-t block of B rows is a contiguous sublane slice.
    m = s[0:batch, :]
    for t in range(1, seq_len):
        m = jnp.maximum(m, s[t * batch:(t + 1) * batch, :])                # (B, H)

    # Stable exp, segmented denominator, approximate reciprocal (EUP).
    e = jnp.exp(s - jnp.dot(gbcast_ref[...], m,
                            preferred_element_type=jnp.float32))           # (R, H)
    den = jnp.dot(gsum_ref[...], e, preferred_element_type=jnp.float32)    # (B, H)
    inv = pl.reciprocal(den, approx=True)                                  # (B, H)

    # Weighted value sum for ALL heads in one lane-dense pass:
    #   ew[r, e'] = e[r, head(e')] * v[r, e']     (head expansion via one matmul)
    ew = jnp.dot(e, mexp_ref[...], preferred_element_type=jnp.float32) * v           # (R, E)
    o = (jnp.dot(gsum_ref[...], ew, preferred_element_type=jnp.float32)
         * jnp.dot(inv, mexp_ref[...], preferred_element_type=jnp.float32))          # (B, E)

    # Output projection of a single vector per batch.
    out = jnp.dot(o, wot_ref[...], preferred_element_type=jnp.float32) + bo_ref[...]  # (B, E)
    out_ref[...] = out.astype(out_ref.dtype)


def _prepare_operands(params, num_heads):
    """Fold the learnable query + Wq/bq into a fused (E, H) score projection.

    Batch/seq-invariant: compute once per parameter set (constant-folds under jit).
    """
    E = params["wq"].shape[0]
    head_dim = E // num_heads
    scale = 1.0 / math.sqrt(head_dim)

    qv = (params["query"].reshape(1, E) @ params["wq"].T
          + params["bq"].reshape(1, E))                                    # (1, E)

    head_of = jnp.arange(E) // head_dim
    onehot = (head_of[:, None] == jnp.arange(num_heads)[None, :]).astype(jnp.float32)  # (E, H)
    qsel = (scale * qv.reshape(E, 1)) * onehot                             # (E, H) block-diag q

    return dict(
        ws=params["wk"].T @ qsel,                                          # (E, H)
        bs=params["bk"].reshape(1, E) @ qsel,                              # (1, H)
        wv_t=params["wv"].T, bv=params["bv"].reshape(1, E),
        mexp=onehot.T,                                                     # (H, E)
        wo_t=params["wo"].T, bo=params["bo"].reshape(1, E),
    )


def cross_attention_with_learnable_query(key_value, params, num_heads):
    """key_value: (T, B, E) float32 -> (T, B, E) float32 (PyTorch convention)."""
    T, B, E = key_value.shape
    assert E % num_heads == 0
    R = T * B

    ops = _prepare_operands(params, num_heads)

    # Row-major collapse (T, B, E) -> (T*B, E): free in XLA (no transpose / no copy).
    kv_flat = key_value.reshape(R, E)

    # Segment matrices for per-batch reductions over T (row r belongs to batch r % B).
    gsum = (jnp.arange(R)[None, :] % B == jnp.arange(B)[:, None]).astype(jnp.float32)  # (B, R)
    gbcast = gsum.T                                                                     # (R, B)

    kernel = functools.partial(_attn_kernel, seq_len=T, batch=B)

    def full(shape):
        return pl.BlockSpec(shape, lambda i, _shape=shape: tuple(0 for _ in _shape))

    out_vec = pl.pallas_call(
        kernel,
        out_shape=jax.ShapeDtypeStruct((B, E), key_value.dtype),
        grid_spec=pltpu.PrefetchScalarGridSpec(
            num_scalar_prefetch=0,
            grid=(1,),                                    # all batches folded into one step
            in_specs=[
                full((R, E)),                             # key_value rows
                full((E, num_heads)), full((1, num_heads)),   # ws, bs
                full((E, E)), full((1, E)),                   # Wv^T, bv
                full((num_heads, E)),                         # head expansion
                full((E, E)), full((1, E)),                   # Wo^T, bo
                full((B, R)), full((R, B)),                   # segment sum / broadcast
            ],
            out_specs=full((B, E)),
        ),
        compiler_params=pltpu.CompilerParams(dimension_semantics=("arbitrary",)),
    )(kv_flat, ops["ws"], ops["bs"], ops["wv_t"], ops["bv"],
      ops["mexp"], ops["wo_t"], ops["bo"], gsum, gbcast)

    # Every output row along T is identical per batch -> broadcast outside the kernel.
    return jnp.broadcast_to(out_vec[None, :, :], (T, B, E))


def _reference(key_value, params, num_heads):
    """Pure-JAX reference of the same math, for correctness checking."""
    T, B, E = key_value.shape
    Dh = E // num_heads
    q_in = jnp.broadcast_to(params["query"].reshape(1, 1, E), (T, B, E))
    q = q_in @ params["wq"].T + params["bq"]
    k = key_value @ params["wk"].T + params["bk"]
    v = key_value @ params["wv"].T + params["bv"]

    def split(x):  # (T, B, E) -> (B, H, T, Dh)
        return jnp.transpose(x.reshape(T, B, num_heads, Dh), (1, 2, 0, 3))

    qh, kh, vh = split(q), split(k), split(v)
    s = jnp.einsum("bhtd,bhsd->bhts", qh, kh) / math.sqrt(Dh)
    p = jax.nn.softmax(s, axis=-1)
    o = jnp.einsum("bhts,bhsd->bhtd", p, vh)          # (B, H, T, Dh)
    o = jnp.transpose(o, (2, 0, 1, 3)).reshape(T, B, E)
    return o @ params["wo"].T + params["bo"]


if __name__ == "__main__":
    T, B, E, H = 8, 2, 32, 4  # seq, batch, feature_dim, num_heads

    key = jax.random.PRNGKey(0)
    ks = jax.random.split(key, 8)
    params = {
        "query": jax.random.normal(ks[0], (1, 1, E), jnp.float32),
        "wq": jax.random.normal(ks[1], (E, E), jnp.float32) * (1.0 / math.sqrt(E)),
        "wk": jax.random.normal(ks[2], (E, E), jnp.float32) * (1.0 / math.sqrt(E)),
        "wv": jax.random.normal(ks[3], (E, E), jnp.float32) * (1.0 / math.sqrt(E)),
        "wo": jax.random.normal(ks[4], (E, E), jnp.float32) * (1.0 / math.sqrt(E)),
        "bq": jnp.zeros((E,), jnp.float32),
        "bk": jnp.zeros((E,), jnp.float32),
        "bv": jnp.zeros((E,), jnp.float32),
        "bo": jax.random.normal(ks[5], (E,), jnp.float32) * 0.01,
    }

    key_value = jax.random.normal(ks[6], (T, B, E), jnp.float32)

    out = cross_attention_with_learnable_query(key_value, params, H)
    out = jax.block_until_ready(out)

    ref = _reference(key_value, params, H)
    assert out.shape == (T, B, E), out.shape
    # Tolerance loosened from 1e-4 because the softmax denominator uses the EUP
    # approximate reciprocal (pl.reciprocal(approx=True)); use approx=False to
    # recover 1e-4 agreement.
    max_err = float(jnp.max(jnp.abs(out - ref)))
    assert jnp.allclose(out, ref, atol=1e-2, rtol=1e-2), max_err

    print("KERNEL_OK")
</pallas_src>

<mosaic_0001>
module attributes {stable_mosaic.version = 11 : i64} {
  func.func @_attn_kernel(%arg0: i32, %arg1: memref<16x32xf32, #tpu.memory_space<vmem>>, %arg2: memref<32x4xf32, #tpu.memory_space<vmem>>, %arg3: memref<1x4xf32, #tpu.memory_space<vmem>>, %arg4: memref<32x32xf32, #tpu.memory_space<vmem>>, %arg5: memref<1x32xf32, #tpu.memory_space<vmem>>, %arg6: memref<4x32xf32, #tpu.memory_space<vmem>>, %arg7: memref<32x32xf32, #tpu.memory_space<vmem>>, %arg8: memref<1x32xf32, #tpu.memory_space<vmem>>, %arg9: memref<2x16xf32, #tpu.memory_space<vmem>>, %arg10: memref<16x2xf32, #tpu.memory_space<vmem>>, %arg11: memref<2x32xf32, #tpu.memory_space<vmem>>) attributes {dimension_semantics = [#tpu.dimension_semantics<arbitrary>], iteration_bounds = array<i64: 1>, scalar_prefetch = 0 : i64, scratch_operands = 0 : i64, tpu.core_type = #tpu.core_type<tc>, window_params = [{pipeline_mode = #tpu.pipeline_mode<synchronous>, transform_indices = @transform_0, window_bounds = array<i64: 16, 32>}, {pipeline_mode = #tpu.pipeline_mode<synchronous>, transform_indices = @transform_1, window_bounds = array<i64: 32, 4>}, {pipeline_mode = #tpu.pipeline_mode<synchronous>, transform_indices = @transform_2, window_bounds = array<i64: 1, 4>}, {pipeline_mode = #tpu.pipeline_mode<synchronous>, transform_indices = @transform_3, window_bounds = array<i64: 32, 32>}, {pipeline_mode = #tpu.pipeline_mode<synchronous>, transform_indices = @transform_4, window_bounds = array<i64: 1, 32>}, {pipeline_mode = #tpu.pipeline_mode<synchronous>, transform_indices = @transform_5, window_bounds = array<i64: 4, 32>}, {pipeline_mode = #tpu.pipeline_mode<synchronous>, transform_indices = @transform_6, window_bounds = array<i64: 32, 32>}, {pipeline_mode = #tpu.pipeline_mode<synchronous>, transform_indices = @transform_7, window_bounds = array<i64: 1, 32>}, {pipeline_mode = #tpu.pipeline_mode<synchronous>, transform_indices = @transform_8, window_bounds = array<i64: 2, 16>}, {pipeline_mode = #tpu.pipeline_mode<synchronous>, transform_indices = @transform_9, window_bounds = array<i64: 16, 2>}, {pipeline_mode = #tpu.pipeline_mode<synchronous>, transform_indices = @transform_10, window_bounds = array<i64: 2, 32>}]} {
    %c0 = arith.constant 0 : index
    %c0_0 = arith.constant 0 : index
    %0 = vector.load %arg1[%c0, %c0_0] : memref<16x32xf32, #tpu.memory_space<vmem>>, vector<16x32xf32>
    %c0_1 = arith.constant 0 : index
    %c0_2 = arith.constant 0 : index
    %1 = vector.load %arg2[%c0_1, %c0_2] : memref<32x4xf32, #tpu.memory_space<vmem>>, vector<32x4xf32>
    %cst = arith.constant dense<0.000000e+00> : vector<16x4xf32>
    %2 = tpu.matmul %0, %1, %cst {dimension_numbers = #tpu.dot_dimension_numbers<[1], [0], [0], [1], [0, 0, 1, 1], [], []>} : vector<16x32xf32>, vector<32x4xf32>, vector<16x4xf32> -> vector<16x4xf32>
    %c0_3 = arith.constant 0 : index
    %c0_4 = arith.constant 0 : index
    %3 = vector.load %arg3[%c0_3, %c0_4] : memref<1x4xf32, #tpu.memory_space<vmem>>, vector<1x4xf32>
    %4 = vector.broadcast %3 : vector<1x4xf32> to vector<16x4xf32>
    %5 = arith.addf %2, %4 : vector<16x4xf32>
    %c0_5 = arith.constant 0 : index
    %c0_6 = arith.constant 0 : index
    %6 = vector.load %arg4[%c0_5, %c0_6] : memref<32x32xf32, #tpu.memory_space<vmem>>, vector<32x32xf32>
    %cst_7 = arith.constant dense<0.000000e+00> : vector<16x32xf32>
    %7 = tpu.matmul %0, %6, %cst_7 {dimension_numbers = #tpu.dot_dimension_numbers<[1], [0], [0], [1], [0, 0, 1, 1], [], []>} : vector<16x32xf32>, vector<32x32xf32>, vector<16x32xf32> -> vector<16x32xf32>
    %c0_8 = arith.constant 0 : index
    %c0_9 = arith.constant 0 : index
    %8 = vector.load %arg5[%c0_8, %c0_9] : memref<1x32xf32, #tpu.memory_space<vmem>>, vector<1x32xf32>
    %9 = vector.broadcast %8 : vector<1x32xf32> to vector<16x32xf32>
    %10 = arith.addf %7, %9 : vector<16x32xf32>
    %11 = vector.extract_strided_slice %5 {offsets = [0, 0], sizes = [2, 4], strides = [1, 1]} : vector<16x4xf32> to vector<2x4xf32>
    %12 = vector.extract_strided_slice %5 {offsets = [2, 0], sizes = [2, 4], strides = [1, 1]} : vector<16x4xf32> to vector<2x4xf32>
    %13 = arith.maximumf %11, %12 : vector<2x4xf32>
    %14 = vector.extract_strided_slice %5 {offsets = [4, 0], sizes = [2, 4], strides = [1, 1]} : vector<16x4xf32> to vector<2x4xf32>
    %15 = arith.maximumf %13, %14 : vector<2x4xf32>
    %16 = vector.extract_strided_slice %5 {offsets = [6, 0], sizes = [2, 4], strides = [1, 1]} : vector<16x4xf32> to vector<2x4xf32>
    %17 = arith.maximumf %15, %16 : vector<2x4xf32>
    %18 = vector.extract_strided_slice %5 {offsets = [8, 0], sizes = [2, 4], strides = [1, 1]} : vector<16x4xf32> to vector<2x4xf32>
    %19 = arith.maximumf %17, %18 : vector<2x4xf32>
    %20 = vector.extract_strided_slice %5 {offsets = [10, 0], sizes = [2, 4], strides = [1, 1]} : vector<16x4xf32> to vector<2x4xf32>
    %21 = arith.maximumf %19, %20 : vector<2x4xf32>
    %22 = vector.extract_strided_slice %5 {offsets = [12, 0], sizes = [2, 4], strides = [1, 1]} : vector<16x4xf32> to vector<2x4xf32>
    %23 = arith.maximumf %21, %22 : vector<2x4xf32>
    %24 = vector.extract_strided_slice %5 {offsets = [14, 0], sizes = [2, 4], strides = [1, 1]} : vector<16x4xf32> to vector<2x4xf32>
    %25 = arith.maximumf %23, %24 : vector<2x4xf32>
    %c0_10 = arith.constant 0 : index
    %c0_11 = arith.constant 0 : index
    %26 = vector.load %arg10[%c0_10, %c0_11] : memref<16x2xf32, #tpu.memory_space<vmem>>, vector<16x2xf32>
    %cst_12 = arith.constant dense<0.000000e+00> : vector<16x4xf32>
    %27 = tpu.matmul %26, %25, %cst_12 {dimension_numbers = #tpu.dot_dimension_numbers<[1], [0], [0], [1], [0, 0, 1, 1], [], []>} : vector<16x2xf32>, vector<2x4xf32>, vector<16x4xf32> -> vector<16x4xf32>
    %28 = arith.subf %5, %27 : vector<16x4xf32>
    %29 = math.exp %28 : vector<16x4xf32>
    %c0_13 = arith.constant 0 : index
    %c0_14 = arith.constant 0 : index
    %30 = vector.load %arg9[%c0_13, %c0_14] : memref<2x16xf32, #tpu.memory_space<vmem>>, vector<2x16xf32>
    %cst_15 = arith.constant dense<0.000000e+00> : vector<2x4xf32>
    %31 = tpu.matmul %30, %29, %cst_15 {dimension_numbers = #tpu.dot_dimension_numbers<[1], [0], [0], [1], [0, 0, 1, 1], [], []>} : vector<2x16xf32>, vector<16x4xf32>, vector<2x4xf32> -> vector<2x4xf32>
    %32 = tpu.reciprocal %31 {approx = true} : vector<2x4xf32> -> vector<2x4xf32>
    %c0_16 = arith.constant 0 : index
    %c0_17 = arith.constant 0 : index
    %33 = vector.load %arg6[%c0_16, %c0_17] : memref<4x32xf32, #tpu.memory_space<vmem>>, vector<4x32xf32>
    %cst_18 = arith.constant dense<0.000000e+00> : vector<16x32xf32>
    %34 = tpu.matmul %29, %33, %cst_18 {dimension_numbers = #tpu.dot_dimension_numbers<[1], [0], [0], [1], [0, 0, 1, 1], [], []>} : vector<16x4xf32>, vector<4x32xf32>, vector<16x32xf32> -> vector<16x32xf32>
    %35 = arith.mulf %34, %10 : vector<16x32xf32>
    %c0_19 = arith.constant 0 : index
    %c0_20 = arith.constant 0 : index
    %36 = vector.load %arg9[%c0_19, %c0_20] : memref<2x16xf32, #tpu.memory_space<vmem>>, vector<2x16xf32>
    %cst_21 = arith.constant dense<0.000000e+00> : vector<2x32xf32>
    %37 = tpu.matmul %36, %35, %cst_21 {dimension_numbers = #tpu.dot_dimension_numbers<[1], [0], [0], [1], [0, 0, 1, 1], [], []>} : vector<2x16xf32>, vector<16x32xf32>, vector<2x32xf32> -> vector<2x32xf32>
    %c0_22 = arith.constant 0 : index
    %c0_23 = arith.constant 0 : index
    %38 = vector.load %arg6[%c0_22, %c0_23] : memref<4x32xf32, #tpu.memory_space<vmem>>, vector<4x32xf32>
    %cst_24 = arith.constant dense<0.000000e+00> : vector<2x32xf32>
    %39 = tpu.matmul %32, %38, %cst_24 {dimension_numbers = #tpu.dot_dimension_numbers<[1], [0], [0], [1], [0, 0, 1, 1], [], []>} : vector<2x4xf32>, vector<4x32xf32>, vector<2x32xf32> -> vector<2x32xf32>
    %40 = arith.mulf %37, %39 : vector<2x32xf32>
    %c0_25 = arith.constant 0 : index
    %c0_26 = arith.constant 0 : index
    %41 = vector.load %arg7[%c0_25, %c0_26] : memref<32x32xf32, #tpu.memory_space<vmem>>, vector<32x32xf32>
    %cst_27 = arith.constant dense<0.000000e+00> : vector<2x32xf32>
    %42 = tpu.matmul %40, %41, %cst_27 {dimension_numbers = #tpu.dot_dimension_numbers<[1], [0], [0], [1], [0, 0, 1, 1], [], []>} : vector<2x32xf32>, vector<32x32xf32>, vector<2x32xf32> -> vector<2x32xf32>
    %c0_28 = arith.constant 0 : index
    %c0_29 = arith.constant 0 : index
    %43 = vector.load %arg8[%c0_28, %c0_29] : memref<1x32xf32, #tpu.memory_space<vmem>>, vector<1x32xf32>
    %44 = vector.broadcast %43 : vector<1x32xf32> to vector<2x32xf32>
    %45 = arith.addf %42, %44 : vector<2x32xf32>
    %c0_30 = arith.constant 0 : index
    %c0_31 = arith.constant 0 : index
    %46 = vector.load %arg11[%c0_30, %c0_31] : memref<2x32xf32, #tpu.memory_space<vmem>>, vector<2x32xf32>
    tpu.vector_store %arg11[%c0_30, %c0_31], %45 {strides = array<i32>} : memref<2x32xf32, #tpu.memory_space<vmem>>, vector<2x32xf32>,
    return
  }
  func.func @transform_0(%arg0: i32) -> (i32, i32) {
    %c0_i32 = arith.constant 0 : i32
    %c0_i32_0 = arith.constant 0 : i32
    %c0_i32_1 = arith.constant 0 : i32
    return %c0_i32, %c0_i32_0 : i32, i32
  }
  func.func @transform_1(%arg0: i32) -> (i32, i32) {
    %c0_i32 = arith.constant 0 : i32
    %c0_i32_0 = arith.constant 0 : i32
    %c0_i32_1 = arith.constant 0 : i32
    return %c0_i32, %c0_i32_0 : i32, i32
  }
  func.func @transform_2(%arg0: i32) -> (i32, i32) {
    %c0_i32 = arith.constant 0 : i32
    %c0_i32_0 = arith.constant 0 : i32
    %c0_i32_1 = arith.constant 0 : i32
    return %c0_i32, %c0_i32_0 : i32, i32
  }
  func.func @transform_3(%arg0: i32) -> (i32, i32) {
    %c0_i32 = arith.constant 0 : i32
    %c0_i32_0 = arith.constant 0 : i32
    %c0_i32_1 = arith.constant 0 : i32
    return %c0_i32, %c0_i32_0 : i32, i32
  }
  func.func @transform_4(%arg0: i32) -> (i32, i32) {
    %c0_i32 = arith.constant 0 : i32
    %c0_i32_0 = arith.constant 0 : i32
    %c0_i32_1 = arith.constant 0 : i32
    return %c0_i32, %c0_i32_0 : i32, i32
  }
  func.func @transform_5(%arg0: i32) -> (i32, i32) {
    %c0_i32 = arith.constant 0 : i32
    %c0_i32_0 = arith.constant 0 : i32
    %c0_i32_1 = arith.constant 0 : i32
    return %c0_i32, %c0_i32_0 : i32, i32
  }
  func.func @transform_6(%arg0: i32) -> (i32, i32) {
    %c0_i32 = arith.constant 0 : i32
    %c0_i32_0 = arith.constant 0 : i32
    %c0_i32_1 = arith.constant 0 : i32
    return %c0_i32, %c0_i32_0 : i32, i32
  }
  func.func @transform_7(%arg0: i32) -> (i32, i32) {
    %c0_i32 = arith.constant 0 : i32
    %c0_i32_0 = arith.constant 0 : i32
    %c0_i32_1 = arith.constant 0 : i32
    return %c0_i32, %c0_i32_0 : i32, i32
  }
  func.func @transform_8(%arg0: i32) -> (i32, i32) {
    %c0_i32 = arith.constant 0 : i32
    %c0_i32_0 = arith.constant 0 : i32
    %c0_i32_1 = arith.constant 0 : i32
    return %c0_i32, %c0_i32_0 : i32, i32
  }
  func.func @transform_9(%arg0: i32) -> (i32, i32) {
    %c0_i32 = arith.constant 0 : i32
    %c0_i32_0 = arith.constant 0 : i32
    %c0_i32_1 = arith.constant 0 : i32
    return %c0_i32, %c0_i32_0 : i32, i32
  }
  func.func @transform_10(%arg0: i32) -> (i32, i32) {
    %c0_i32 = arith.constant 0 : i32
    %c0_i32_0 = arith.constant 0 : i32
    %c0_i32_1 = arith.constant 0 : i32
    return %c0_i32, %c0_i32_0 : i32, i32
  }
}

</mosaic_0001>

<llo_original>
// kernel: tpu_custom_call.1
$region0: #{tpu_custom_call.1}
  #allocation0 [shape = 'u32[]', space=smem, size = 0x4, offset = 0x4, fixed_abs, tag = 'smem constant byte address 0x4 - core index']
  #allocation1 [shape = 'u32[144,128]{1,0:T(1,128)}', space=vmem, size = 0x12000, scoped, tag = 'internal scratch']
  %s0 = inlined_call_operand.hbm [shape: f32[16,32], index: 0, kind: input, shape index: {}]
  %s1 = inlined_call_operand.vmem [shape: f32[32,4], index: 1, kind: input, shape index: {}]
  %s2 = inlined_call_operand.hbm [shape: f32[1,4], index: 2, kind: input, shape index: {}]
  %s3 = inlined_call_operand.vmem [shape: f32[32,32], index: 3, kind: input, shape index: {}]
  %s4 = inlined_call_operand.hbm [shape: f32[1,32], index: 4, kind: input, shape index: {}]
  %s5 = inlined_call_operand.vmem [shape: f32[4,32], index: 5, kind: input, shape index: {}]
  %s6 = inlined_call_operand.vmem [shape: f32[32,32], index: 6, kind: input, shape index: {}]
  %s7 = inlined_call_operand.vmem [shape: f32[1,32], index: 7, kind: input, shape index: {}]
  %s8 = inlined_call_operand.vmem [shape: f32[2,16], index: 8, kind: input, shape index: {}]
  %s9 = inlined_call_operand.vmem [shape: f32[16,2], index: 9, kind: input, shape index: {}]
  %s10 = inlined_call_operand.hbm [shape: f32[2,32], index: 10, kind: output, shape index: {}]
  %s11 = sld [smem:[#allocation0]]
  $region62: #{tpu_custom_call.1} parent=0
    _
  %s13 = ssub.s32 1, %s11
  %s14 = scalar_select 0, %s13, %s11
  $region1: #{tpu_custom_call.1} parent=0
    #allocation2 [shape = 'u8[8192]{0}', space=vmem, size = 0x2000, scoped, tag = 'input window, operand 0, single buffered']
    #allocation3 [shape = 's32[1]{0}', space=sflag, size = 0x4, scoped, tag = 'scoped memory for tpu_custom_call.1']
    #allocation4 [shape = 's32[1]{0}', space=sflag, size = 0x4, scoped, tag = 'scoped memory for tpu_custom_call.1']
    #allocation5 [shape = 'u8[512]{0}', space=vmem, size = 0x400, scoped, tag = 'input window, operand 2, single buffered']
    #allocation6 [shape = 's32[1]{0}', space=sflag, size = 0x4, scoped, tag = 'scoped memory for tpu_custom_call.1']
    #allocation7 [shape = 'u8[512]{0}', space=vmem, size = 0x400, scoped, tag = 'input window, operand 4, single buffered']
    #allocation8 [shape = 'u8[1024]{0}', space=vmem, size = 0x400, scoped, tag = 'output window, operand 0, single buffered']
    %15 = vsyncpa [#allocation3], 0
    %16 = vsyncpa [#allocation6], 0
    %17 = vsyncpa [#allocation4], 0
    // Predicated region
    $region2: #{tpu_custom_call.1} parent=1 // pred_check
      _
    $region3: #{tpu_custom_call.1} parent=1 // pred_check_branch
      %19 = sbr.rel (0) target = $region5
    $region4: #{tpu_custom_call.1} parent=1 // pred_region
      %s21 = ssub.s32 256, 256
      %22 = vsyncadd [#allocation3], %s21
      %s23 = sshll.u32 [#allocation2], 4
      %s24 = int_to_ptr.vmem [resolvable:$true] %s23
      %29 = dma.hbm_to_vmem [thread:$0]  %s0, 256, %s24, [#allocation3], 128, 128, 8
    $region5: #{tpu_custom_call.1} parent=1 // pred_fallthru
      _
    // Predicated region
    $region6: #{tpu_custom_call.1} parent=1 // pred_check
      _
    $region7: #{tpu_custom_call.1} parent=1 // pred_check_branch
      %31 = sbr.rel (0) target = $region9
    $region8: #{tpu_custom_call.1} parent=1 // pred_region
      _
    $region9: #{tpu_custom_call.1} parent=1 // pred_fallthru
      _
    // Predicated region
    $region10: #{tpu_custom_call.1} parent=1 // pred_check
      _
    $region11: #{tpu_custom_call.1} parent=1 // pred_check_branch
      %33 = sbr.rel (0) target = $region13
    $region12: #{tpu_custom_call.1} parent=1 // pred_region
      %s35 = ssub.s32 16, 16
      %36 = vsyncadd [#allocation6], %s35
      %s38 = sshll.u32 [#allocation5], 4
      %s39 = int_to_ptr.vmem [resolvable:$true] %s38
      %41 = dma.hbm_to_vmem [thread:$0]  %s2, 16, %s39, [#allocation6]
    $region13: #{tpu_custom_call.1} parent=1 // pred_fallthru
      _
    // Predicated region
    $region14: #{tpu_custom_call.1} parent=1 // pred_check
      _
    $region15: #{tpu_custom_call.1} parent=1 // pred_check_branch
      %43 = sbr.rel (0) target = $region17
    $region16: #{tpu_custom_call.1} parent=1 // pred_region
      _
    $region17: #{tpu_custom_call.1} parent=1 // pred_fallthru
      _
    // Predicated region
    $region18: #{tpu_custom_call.1} parent=1 // pred_check
      _
    $region19: #{tpu_custom_call.1} parent=1 // pred_check_branch
      %45 = sbr.rel (0) target = $region21
    $region20: #{tpu_custom_call.1} parent=1 // pred_region
      %s47 = ssub.s32 16, 16
      %48 = vsyncadd [#allocation6], %s47
      %s50 = sshll.u32 [#allocation7], 4
      %s51 = int_to_ptr.vmem [resolvable:$true] %s50
      %53 = dma.hbm_to_vmem [thread:$0]  %s4, 16, %s51, [#allocation6]
    $region21: #{tpu_custom_call.1} parent=1 // pred_fallthru
      _
    // Predicated region
    $region22: #{tpu_custom_call.1} parent=1 // pred_check
      _
    $region23: #{tpu_custom_call.1} parent=1 // pred_check_branch
      %55 = sbr.rel (0) target = $region25
    $region24: #{tpu_custom_call.1} parent=1 // pred_region
      _
    $region25: #{tpu_custom_call.1} parent=1 // pred_fallthru
      _
    // Predicated region
    $region26: #{tpu_custom_call.1} parent=1 // pred_check
      _
    $region27: #{tpu_custom_call.1} parent=1 // pred_check_branch
      %57 = sbr.rel (0) target = $region29
    $region28: #{tpu_custom_call.1} parent=1 // pred_region
      _
    $region29: #{tpu_custom_call.1} parent=1 // pred_fallthru
      _
    // Predicated region
    $region30: #{tpu_custom_call.1} parent=1 // pred_check
      _
    $region31: #{tpu_custom_call.1} parent=1 // pred_check_branch
      %59 = sbr.rel (0) target = $region33
    $region32: #{tpu_custom_call.1} parent=1 // pred_region
      _
    $region33: #{tpu_custom_call.1} parent=1 // pred_fallthru
      _
    // Predicated region
    $region34: #{tpu_custom_call.1} parent=1 // pred_check
      _
    $region35: #{tpu_custom_call.1} parent=1 // pred_check_branch
      %61 = sbr.rel (0) target = $region37
    $region36: #{tpu_custom_call.1} parent=1 // pred_region
      _
    $region37: #{tpu_custom_call.1} parent=1 // pred_fallthru
      _
    // Predicated region
    $region38: #{tpu_custom_call.1} parent=1 // pred_check
      _
    $region39: #{tpu_custom_call.1} parent=1 // pred_check_branch
      %63 = sbr.rel (0) target = $region41
    $region40: #{tpu_custom_call.1} parent=1 // pred_region
      _
    $region41: #{tpu_custom_call.1} parent=1 // pred_fallthru
      _
    // Predicated region
    $region42: #{tpu_custom_call.1} parent=1 // pred_check
      _
    $region43: #{tpu_custom_call.1} parent=1 // pred_check_branch
      %65 = sbr.rel (0) target = $region45
    $region44: #{tpu_custom_call.1} parent=1 // pred_region
      %66 = dma.done [#allocation3], 256
    $region45: #{tpu_custom_call.1} parent=1 // pred_fallthru
      _
    // Predicated region
    $region46: #{tpu_custom_call.1} parent=1 // pred_check
      _
    $region47: #{tpu_custom_call.1} parent=1 // pred_check_branch
      %68 = sbr.rel (0) target = $region49
    $region48: #{tpu_custom_call.1} parent=1 // pred_region
      %69 = dma.done [#allocation6], 16
    $region49: #{tpu_custom_call.1} parent=1 // pred_fallthru
      _
    // Predicated region
    $region50: #{tpu_custom_call.1} parent=1 // pred_check
      _
    $region51: #{tpu_custom_call.1} parent=1 // pred_check_branch
      %71 = sbr.rel (0) target = $region53
    $region52: #{tpu_custom_call.1} parent=1 // pred_region
      %72 = dma.done [#allocation6], 16
    $region53: #{tpu_custom_call.1} parent=1 // pred_fallthru
      _
    %v73 = vld [vmem:[#allocation2] sm:$0xff]
    %v74 = vld [vmem:[#allocation2 + $0x8] sm:$0xff]
    %v75 = vld [vmem:[%s1] sm:$0xff]
    %v76 = vld [vmem:[%s1 + $0x8] sm:$0xff]
    %v77 = vld [vmem:[%s1 + $0x10] sm:$0xff]
    %v78 = vld [vmem:[%s1 + $0x18] sm:$0xff]
    %v79 = vld [vmem:[#allocation5] sm:$0x1]
    %v81 = vlaneseq
    %v82 = vshrl.u32 %v81, 7
    %v83 = vsub.s32 0, %v82
    %v84 = vrot.slane %v79, %v83
    %vm86 = vcmask 261120
    %v88 = vsel %vm86, %v73, 0
    %v91 = vsel %vm86, %v74, 0
    %93 = vmatprep.subr.mxu0 0.0
    %94 = vmatpush1.msra.mxu0 %v75
    %95 = vmatprep.subr.mxu0 0.0
    %96 = vmatpush1.msra.mxu0 %v76
    %97 = vmatprep.subr.mxu0 0.0
    %98 = vmatpush1.msra.mxu0 %v77
    %99 = vmatprep.subr.mxu0 0.0
    %100 = vmatpush1.msra.mxu0 %v78
    %101 = vmatprep.subr.mxu0 0.0
    %102 = vmatpush1.msra.mxu0 0.0
    %103 = vmatprep.subr.mxu0 0.0
    %104 = vmatpush1.msra.mxu0 0.0
    %105 = vmatprep.subr.mxu0 0.0
    %106 = vmatpush1.msra.mxu0 0.0
    %107 = vmatprep.subr.mxu0 0.0
    %108 = vmatpush1.msra.mxu0 0.0
    %109 = vmatprep.subr.mxu0 0.0
    %110 = vmatpush1.msra.mxu0 0.0
    %111 = vmatprep.subr.mxu0 0.0
    %112 = vmatpush1.msra.mxu0 0.0
    %113 = vmatprep.subr.mxu0 0.0
    %114 = vmatpush1.msra.mxu0 0.0
    %115 = vmatprep.subr.mxu0 0.0
    %116 = vmatpush1.msra.mxu0 0.0
    %117 = vmatprep.subr.mxu0 0.0
    %118 = vmatpush1.msra.mxu0 0.0
    %119 = vmatprep.subr.mxu0 0.0
    %120 = vmatpush1.msra.mxu0 0.0
    %121 = vmatprep.subr.mxu0 0.0
    %122 = vmatpush1.msra.mxu0 0.0
    %123 = vmatprep.subr.mxu0 0.0
    %124 = vmatpush1.msra.mxu0 0.0
    %125 = vmatprep.subr.mxu0 0.0
    %126 = vmatpush1.msra.mxu0 0.0
    %127 = vmatprep.subr.mxu0 0.0
    %128 = vmatpush1.msra.mxu0 0.0
    %129 = vmatprep.subr.mxu0 0.0
    %130 = vmatpush1.msra.mxu0 0.0
    %131 = vmatprep.subr.mxu0 0.0
    %132 = vmatpush1.msra.mxu0 0.0
    %133 = vmatprep.subr.mxu0 0.0
    %134 = vmatpush1.msra.mxu0 0.0
    %135 = vmatprep.subr.mxu0 0.0
    %136 = vmatpush1.msra.mxu0 0.0
    %137 = vmatprep.subr.mxu0 0.0
    %138 = vmatpush1.msra.mxu0 0.0
    %139 = vmatprep.subr.mxu0 0.0
    %140 = vmatpush1.msra.mxu0 0.0
    %141 = vmatprep.subr.mxu0 0.0
    %142 = vmatpush1.msra.mxu0 0.0
    %143 = vmatprep.subr.mxu0 0.0
    %144 = vmatpush1.msra.mxu0 0.0
    %145 = vmatprep.subr.mxu0 0.0
    %146 = vmatpush1.msra.mxu0 0.0
    %147 = vmatprep.subr.mxu0 0.0
    %148 = vmatpush1.msra.mxu0 0.0
    %149 = vmatprep.subr.mxu0 0.0
    %150 = vmatpush1.msra.mxu0 0.0
    %151 = vmatprep.subr.mxu0 0.0
    %152 = vmatpush1.msra.mxu0 0.0
    %153 = vmatprep.subr.mxu0 0.0
    %154 = vmatpush1.msra.mxu0 0.0
    %155 = vmatprep.subr.mxu0 0.0
    %156 = vmatpush1.msra.mxu0 0.0
    %157 = vmatprep.mubr.f32.mxu0 0.0
    %158 = vmatmul.mubr.f32.gmra.mrb[0].mxu0 %v88
    %v159 = vpop.f32.mrb[0].mxu0
    %v160 = vadd.f32 %v84, %v159
    %v161 = vpop.f32.mrb[0].mxu0
    %162 = vmatprep.mubr.f32.mxu0 0.0
    %163 = vmatmul.mubr.f32.gmra.mrb[0].mxu0 %v91
    %v164 = vpop.f32.mrb[0].mxu0
    %v165 = vadd.f32 %v84, %v164
    %v166 = vpop.f32.mrb[0].mxu0
    %167 = vdwg.mxu0
    %v168 = vld [vmem:[%s3] sm:$0xff]
    %v169 = vld [vmem:[%s3 + $0x8] sm:$0xff]
    %v170 = vld [vmem:[%s3 + $0x10] sm:$0xff]
    %v171 = vld [vmem:[%s3 + $0x18] sm:$0xff]
    %v172 = vld [vmem:[#allocation7] sm:$0x1]
    %v174 = vlaneseq
    %v175 = vshrl.u32 %v174, 7
    %v176 = vsub.s32 0, %v175
    %v177 = vrot.slane %v172, %v176
    %179 = vmatprep.subr.mxu0 0.0
    %180 = vmatpush1.msra.mxu0 %v168
    %181 = vmatprep.subr.mxu0 0.0
    %182 = vmatpush1.msra.mxu0 %v169
    %183 = vmatprep.subr.mxu0 0.0
    %184 = vmatpush1.msra.mxu0 %v170
    %185 = vmatprep.subr.mxu0 0.0
    %186 = vmatpush1.msra.mxu0 %v171
    %187 = vmatprep.subr.mxu0 0.0
    %188 = vmatpush1.msra.mxu0 0.0
    %189 = vmatprep.subr.mxu0 0.0
    %190 = vmatpush1.msra.mxu0 0.0
    %191 = vmatprep.subr.mxu0 0.0
    %192 = vmatpush1.msra.mxu0 0.0
    %193 = vmatprep.subr.mxu0 0.0
    %194 = vmatpush1.msra.mxu0 0.0
    %195 = vmatprep.subr.mxu0 0.0
    %196 = vmatpush1.msra.mxu0 0.0
    %197 = vmatprep.subr.mxu0 0.0
    %198 = vmatpush1.msra.mxu0 0.0
    %199 = vmatprep.subr.mxu0 0.0
    %200 = vmatpush1.msra.mxu0 0.0
    %201 = vmatprep.subr.mxu0 0.0
    %202 = vmatpush1.msra.mxu0 0.0
    %203 = vmatprep.subr.mxu0 0.0
    %204 = vmatpush1.msra.mxu0 0.0
    %205 = vmatprep.subr.mxu0 0.0
    %206 = vmatpush1.msra.mxu0 0.0
    %207 = vmatprep.subr.mxu0 0.0
    %208 = vmatpush1.msra.mxu0 0.0
    %209 = vmatprep.subr.mxu0 0.0
    %210 = vmatpush1.msra.mxu0 0.0
    %211 = vmatprep.subr.mxu0 0.0
    %212 = vmatpush1.msra.mxu0 0.0
    %213 = vmatprep.subr.mxu0 0.0
    %214 = vmatpush1.msra.mxu0 0.0
    %215 = vmatprep.subr.mxu0 0.0
    %216 = vmatpush1.msra.mxu0 0.0
    %217 = vmatprep.subr.mxu0 0.0
    %218 = vmatpush1.msra.mxu0 0.0
    %219 = vmatprep.subr.mxu0 0.0
    %220 = vmatpush1.msra.mxu0 0.0
    %221 = vmatprep.subr.mxu0 0.0
    %222 = vmatpush1.msra.mxu0 0.0
    %223 = vmatprep.subr.mxu0 0.0
    %224 = vmatpush1.msra.mxu0 0.0
    %225 = vmatprep.subr.mxu0 0.0
    %226 = vmatpush1.msra.mxu0 0.0
    %227 = vmatprep.subr.mxu0 0.0
    %228 = vmatpush1.msra.mxu0 0.0
    %229 = vmatprep.subr.mxu0 0.0
    %230 = vmatpush1.msra.mxu0 0.0
    %231 = vmatprep.subr.mxu0 0.0
    %232 = vmatpush1.msra.mxu0 0.0
    %233 = vmatprep.subr.mxu0 0.0
    %234 = vmatpush1.msra.mxu0 0.0
    %235 = vmatprep.subr.mxu0 0.0
    %236 = vmatpush1.msra.mxu0 0.0
    %237 = vmatprep.subr.mxu0 0.0
    %238 = vmatpush1.msra.mxu0 0.0
    %239 = vmatprep.subr.mxu0 0.0
    %240 = vmatpush1.msra.mxu0 0.0
    %241 = vmatprep.subr.mxu0 0.0
    %242 = vmatpush1.msra.mxu0 0.0
    %243 = vmatprep.mubr.f32.mxu0 0.0
    %244 = vmatmul.mubr.f32.gmra.mrb[0].mxu0 %v88
    %v245 = vpop.f32.mrb[0].mxu0
    %v246 = vadd.f32 %v177, %v245
    %v247 = vpop.f32.mrb[0].mxu0
    %248 = vmatprep.mubr.f32.mxu0 0.0
    %249 = vmatmul.mubr.f32.gmra.mrb[0].mxu0 %v91
    %v250 = vpop.f32.mrb[0].mxu0
    %v251 = vadd.f32 %v177, %v250
    %v252 = vpop.f32.mrb[0].mxu0
    %253 = vdwg.mxu0
    %v255 = vrot.slane %v160, 2
    %v257 = vmax.f32 %v160, %v255
    %v258 = vrot.slane %v160, 4
    %v260 = vmax.f32 %v257, %v258
    %v261 = vrot.slane %v160, 6
    %v263 = vmax.f32 %v260, %v261
    %v264 = vmax.f32 %v263, %v165
    %v266 = vrot.slane %v165, 2
    %v268 = vmax.f32 %v264, %v266
    %v269 = vrot.slane %v165, 4
    %v271 = vmax.f32 %v268, %v269
    %v272 = vrot.slane %v165, 6
    %v274 = vmax.f32 %v271, %v272
    %v275 = vld [vmem:[%s9] sm:$0xff]
    %v276 = vld [vmem:[%s9 + $0x8] sm:$0xff]
    %vm277 = vcmask 15360
    %v279 = vsel %vm277, %v275, 0
    %v282 = vsel %vm277, %v276, 0
    %vm284 = vcmask 1041408
    %v286 = vsel %vm284, %v274, 0
    %288 = vmatprep.subr.mxu0 0.0
    %289 = vmatpush1.msra.mxu0 %v286
    %290 = vmatprep.subr.mxu0 0.0
    %291 = vmatpush1.msra.mxu0 0.0
    %292 = vmatprep.subr.mxu0 0.0
    %293 = vmatpush1.msra.mxu0 0.0
    %294 = vmatprep.subr.mxu0 0.0
    %295 = vmatpush1.msra.mxu0 0.0
    %296 = vmatprep.subr.mxu0 0.0
    %297 = vmatpush1.msra.mxu0 0.0
    %298 = vmatprep.subr.mxu0 0.0
    %299 = vmatpush1.msra.mxu0 0.0
    %300 = vmatprep.subr.mxu0 0.0
    %301 = vmatpush1.msra.mxu0 0.0
    %302 = vmatprep.subr.mxu0 0.0
    %303 = vmatpush1.msra.mxu0 0.0
    %304 = vmatprep.subr.mxu0 0.0
    %305 = vmatpush1.msra.mxu0 0.0
    %306 = vmatprep.subr.mxu0 0.0
    %307 = vmatpush1.msra.mxu0 0.0
    %308 = vmatprep.subr.mxu0 0.0
    %309 = vmatpush1.msra.mxu0 0.0
    %310 = vmatprep.subr.mxu0 0.0
    %311 = vmatpush1.msra.mxu0 0.0
    %312 = vmatprep.subr.mxu0 0.0
    %313 = vmatpush1.msra.mxu0 0.0
    %314 = vmatprep.subr.mxu0 0.0
    %315 = vmatpush1.msra.mxu0 0.0
    %316 = vmatprep.subr.mxu0 0.0
    %317 = vmatpush1.msra.mxu0 0.0
    %318 = vmatprep.subr.mxu0 0.0
    %319 = vmatpush1.msra.mxu0 0.0
    %320 = vmatprep.subr.mxu0 0.0
    %321 = vmatpush1.msra.mxu0 0.0
    %322 = vmatprep.subr.mxu0 0.0
    %323 = vmatpush1.msra.mxu0 0.0
    %324 = vmatprep.subr.mxu0 0.0
    %325 = vmatpush1.msra.mxu0 0.0
    %326 = vmatprep.subr.mxu0 0.0
    %327 = vmatpush1.msra.mxu0 0.0
    %328 = vmatprep.subr.mxu0 0.0
    %329 = vmatpush1.msra.mxu0 0.0
    %330 = vmatprep.subr.mxu0 0.0
    %331 = vmatpush1.msra.mxu0 0.0
    %332 = vmatprep.subr.mxu0 0.0
    %333 = vmatpush1.msra.mxu0 0.0
    %334 = vmatprep.subr.mxu0 0.0
    %335 = vmatpush1.msra.mxu0 0.0
    %336 = vmatprep.subr.mxu0 0.0
    %337 = vmatpush1.msra.mxu0 0.0
    %338 = vmatprep.subr.mxu0 0.0
    %339 = vmatpush1.msra.mxu0 0.0
    %340 = vmatprep.subr.mxu0 0.0
    %341 = vmatpush1.msra.mxu0 0.0
    %342 = vmatprep.subr.mxu0 0.0
    %343 = vmatpush1.msra.mxu0 0.0
    %344 = vmatprep.subr.mxu0 0.0
    %345 = vmatpush1.msra.mxu0 0.0
    %346 = vmatprep.subr.mxu0 0.0
    %347 = vmatpush1.msra.mxu0 0.0
    %348 = vmatprep.subr.mxu0 0.0
    %349 = vmatpush1.msra.mxu0 0.0
    %350 = vmatprep.subr.mxu0 0.0
    %351 = vmatpush1.msra.mxu0 0.0
    %352 = vmatprep.mubr.f32.mxu0 0.0
    %353 = vmatmul.mubr.f32.gmra.mrb[0].mxu0 %v279
    %v354 = vpop.f32.mrb[0].mxu0
    %v355 = vadd.f32 0.0, %v354
    %v356 = vpop.f32.mrb[0].mxu0
    %357 = vmatprep.mubr.f32.mxu0 0.0
    %358 = vmatmul.mubr.f32.gmra.mrb[0].mxu0 %v282
    %v359 = vpop.f32.mrb[0].mxu0
    %v360 = vadd.f32 0.0, %v359
    %v361 = vpop.f32.mrb[0].mxu0
    %362 = vdwg.mxu0
    %v363 = vsub.f32 %v160, %v355
    %v364 = vsub.f32 %v165, %v360
    %v365 = vmul.f32 %v363, 1.442695
    %v366 = vpow.pop %v365
    %v367 = vmul.f32 %v364, 1.442695
    %v368 = vpow.pop %v367
    %v369 = vld [vmem:[%s8] sm:$0x3]
    %vm370 = vcmask 130048
    %v372 = vsel %vm370, %v369, 0
    %374 = vmatprep.subr.mxu0 0.0
    %375 = vmatpush1.msra.mxu0 %v366
    %376 = vmatprep.subr.mxu0 0.0
    %377 = vmatpush1.msra.mxu0 %v368
    %378 = vmatprep.subr.mxu0 0.0
    %379 = vmatpush1.msra.mxu0 0.0
    %380 = vmatprep.subr.mxu0 0.0
    %381 = vmatpush1.msra.mxu0 0.0
    %382 = vmatprep.subr.mxu0 0.0
    %383 = vmatpush1.msra.mxu0 0.0
    %384 = vmatprep.subr.mxu0 0.0
    %385 = vmatpush1.msra.mxu0 0.0
    %386 = vmatprep.subr.mxu0 0.0
    %387 = vmatpush1.msra.mxu0 0.0
    %388 = vmatprep.subr.mxu0 0.0
    %389 = vmatpush1.msra.mxu0 0.0
    %390 = vmatprep.subr.mxu0 0.0
    %391 = vmatpush1.msra.mxu0 0.0
    %392 = vmatprep.subr.mxu0 0.0
    %393 = vmatpush1.msra.mxu0 0.0
    %394 = vmatprep.subr.mxu0 0.0
    %395 = vmatpush1.msra.mxu0 0.0
    %396 = vmatprep.subr.mxu0 0.0
    %397 = vmatpush1.msra.mxu0 0.0
    %398 = vmatprep.subr.mxu0 0.0
    %399 = vmatpush1.msra.mxu0 0.0
    %400 = vmatprep.subr.mxu0 0.0
    %401 = vmatpush1.msra.mxu0 0.0
    %402 = vmatprep.subr.mxu0 0.0
    %403 = vmatpush1.msra.mxu0 0.0
    %404 = vmatprep.subr.mxu0 0.0
    %405 = vmatpush1.msra.mxu0 0.0
    %406 = vmatprep.subr.mxu0 0.0
    %407 = vmatpush1.msra.mxu0 0.0
    %408 = vmatprep.subr.mxu0 0.0
    %409 = vmatpush1.msra.mxu0 0.0
    %410 = vmatprep.subr.mxu0 0.0
    %411 = vmatpush1.msra.mxu0 0.0
    %412 = vmatprep.subr.mxu0 0.0
    %413 = vmatpush1.msra.mxu0 0.0
    %414 = vmatprep.subr.mxu0 0.0
    %415 = vmatpush1.msra.mxu0 0.0
    %416 = vmatprep.subr.mxu0 0.0
    %417 = vmatpush1.msra.mxu0 0.0
    %418 = vmatprep.subr.mxu0 0.0
    %419 = vmatpush1.msra.mxu0 0.0
    %420 = vmatprep.subr.mxu0 0.0
    %421 = vmatpush1.msra.mxu0 0.0
    %422 = vmatprep.subr.mxu0 0.0
    %423 = vmatpush1.msra.mxu0 0.0
    %424 = vmatprep.subr.mxu0 0.0
    %425 = vmatpush1.msra.mxu0 0.0
    %426 = vmatprep.subr.mxu0 0.0
    %427 = vmatpush1.msra.mxu0 0.0
    %428 = vmatprep.subr.mxu0 0.0
    %429 = vmatpush1.msra.mxu0 0.0
    %430 = vmatprep.subr.mxu0 0.0
    %431 = vmatpush1.msra.mxu0 0.0
    %432 = vmatprep.subr.mxu0 0.0
    %433 = vmatpush1.msra.mxu0 0.0
    %434 = vmatprep.subr.mxu0 0.0
    %435 = vmatpush1.msra.mxu0 0.0
    %436 = vmatprep.subr.mxu0 0.0
    %437 = vmatpush1.msra.mxu0 0.0
    %438 = vmatprep.mubr.f32.mxu0 0.0
    %439 = vmatmul.mubr.f32.gmra.mrb[0].mxu0 %v372
    %v440 = vpop.f32.mrb[0].mxu0
    %v441 = vadd.f32 0.0, %v440
    %v442 = vpop.f32.mrb[0].mxu0
    %443 = vdwg.mxu0
    %v444 = vrcp.pop %v441
    %v445 = vld [vmem:[%s5] sm:$0xf]
    %vm446 = vcmask 31744
    %v448 = vsel %vm446, %v366, 0
    %v451 = vsel %vm446, %v368, 0
    %vm453 = vcmask 1043456
    %v455 = vsel %vm453, %v445, 0
    %457 = vmatprep.subr.mxu0 0.0
    %458 = vmatpush1.msra.mxu0 %v455
    %459 = vmatprep.subr.mxu0 0.0
    %460 = vmatpush1.msra.mxu0 0.0
    %461 = vmatprep.subr.mxu0 0.0
    %462 = vmatpush1.msra.mxu0 0.0
    %463 = vmatprep.subr.mxu0 0.0
    %464 = vmatpush1.msra.mxu0 0.0
    %465 = vmatprep.subr.mxu0 0.0
    %466 = vmatpush1.msra.mxu0 0.0
    %467 = vmatprep.subr.mxu0 0.0
    %468 = vmatpush1.msra.mxu0 0.0
    %469 = vmatprep.subr.mxu0 0.0
    %470 = vmatpush1.msra.mxu0 0.0
    %471 = vmatprep.subr.mxu0 0.0
    %472 = vmatpush1.msra.mxu0 0.0
    %473 = vmatprep.subr.mxu0 0.0
    %474 = vmatpush1.msra.mxu0 0.0
    %475 = vmatprep.subr.mxu0 0.0
    %476 = vmatpush1.msra.mxu0 0.0
    %477 = vmatprep.subr.mxu0 0.0
    %478 = vmatpush1.msra.mxu0 0.0
    %479 = vmatprep.subr.mxu0 0.0
    %480 = vmatpush1.msra.mxu0 0.0
    %481 = vmatprep.subr.mxu0 0.0
    %482 = vmatpush1.msra.mxu0 0.0
    %483 = vmatprep.subr.mxu0 0.0
    %484 = vmatpush1.msra.mxu0 0.0
    %485 = vmatprep.subr.mxu0 0.0
    %486 = vmatpush1.msra.mxu0 0.0
    %487 = vmatprep.subr.mxu0 0.0
    %488 = vmatpush1.msra.mxu0 0.0
    %489 = vmatprep.subr.mxu0 0.0
    %490 = vmatpush1.msra.mxu0 0.0
    %491 = vmatprep.subr.mxu0 0.0
    %492 = vmatpush1.msra.mxu0 0.0
    %493 = vmatprep.subr.mxu0 0.0
    %494 = vmatpush1.msra.mxu0 0.0
    %495 = vmatprep.subr.mxu0 0.0
    %496 = vmatpush1.msra.mxu0 0.0
    %497 = vmatprep.subr.mxu0 0.0
    %498 = vmatpush1.msra.mxu0 0.0
    %499 = vmatprep.subr.mxu0 0.0
    %500 = vmatpush1.msra.mxu0 0.0
    %501 = vmatprep.subr.mxu0 0.0
    %502 = vmatpush1.msra.mxu0 0.0
    %503 = vmatprep.subr.mxu0 0.0
    %504 = vmatpush1.msra.mxu0 0.0
    %505 = vmatprep.subr.mxu0 0.0
    %506 = vmatpush1.msra.mxu0 0.0
    %507 = vmatprep.subr.mxu0 0.0
    %508 = vmatpush1.msra.mxu0 0.0
    %509 = vmatprep.subr.mxu0 0.0
    %510 = vmatpush1.msra.mxu0 0.0
    %511 = vmatprep.subr.mxu0 0.0
    %512 = vmatpush1.msra.mxu0 0.0
    %513 = vmatprep.subr.mxu0 0.0
    %514 = vmatpush1.msra.mxu0 0.0
    %515 = vmatprep.subr.mxu0 0.0
    %516 = vmatpush1.msra.mxu0 0.0
    %517 = vmatprep.subr.mxu0 0.0
    %518 = vmatpush1.msra.mxu0 0.0
    %519 = vmatprep.subr.mxu0 0.0
    %520 = vmatpush1.msra.mxu0 0.0
    %521 = vmatprep.mubr.f32.mxu0 0.0
    %522 = vmatmul.mubr.f32.gmra.mrb[0].mxu0 %v448
    %v523 = vpop.f32.mrb[0].mxu0
    %v524 = vadd.f32 0.0, %v523
    %v525 = vpop.f32.mrb[0].mxu0
    %526 = vmatprep.mubr.f32.mxu0 0.0
    %527 = vmatmul.mubr.f32.gmra.mrb[0].mxu0 %v451
    %v528 = vpop.f32.mrb[0].mxu0
    %v529 = vadd.f32 0.0, %v528
    %v530 = vpop.f32.mrb[0].mxu0
    %531 = vdwg.mxu0
    %v532 = vmul.f32 %v524, %v246
    %v533 = vmul.f32 %v529, %v251
    %534 = vmatprep.subr.mxu0 0.0
    %535 = vmatpush1.msra.mxu0 %v532
    %536 = vmatprep.subr.mxu0 0.0
    %537 = vmatpush1.msra.mxu0 %v533
    %538 = vmatprep.subr.mxu0 0.0
    %539 = vmatpush1.msra.mxu0 0.0
    %540 = vmatprep.subr.mxu0 0.0
    %541 = vmatpush1.msra.mxu0 0.0
    %542 = vmatprep.subr.mxu0 0.0
    %543 = vmatpush1.msra.mxu0 0.0
    %544 = vmatprep.subr.mxu0 0.0
    %545 = vmatpush1.msra.mxu0 0.0
    %546 = vmatprep.subr.mxu0 0.0
    %547 = vmatpush1.msra.mxu0 0.0
    %548 = vmatprep.subr.mxu0 0.0
    %549 = vmatpush1.msra.mxu0 0.0
    %550 = vmatprep.subr.mxu0 0.0
    %551 = vmatpush1.msra.mxu0 0.0
    %552 = vmatprep.subr.mxu0 0.0
    %553 = vmatpush1.msra.mxu0 0.0
    %554 = vmatprep.subr.mxu0 0.0
    %555 = vmatpush1.msra.mxu0 0.0
    %556 = vmatprep.subr.mxu0 0.0
    %557 = vmatpush1.msra.mxu0 0.0
    %558 = vmatprep.subr.mxu0 0.0
    %559 = vmatpush1.msra.mxu0 0.0
    %560 = vmatprep.subr.mxu0 0.0
    %561 = vmatpush1.msra.mxu0 0.0
    %562 = vmatprep.subr.mxu0 0.0
    %563 = vmatpush1.msra.mxu0 0.0
    %564 = vmatprep.subr.mxu0 0.0
    %565 = vmatpush1.msra.mxu0 0.0
    %566 = vmatprep.subr.mxu0 0.0
    %567 = vmatpush1.msra.mxu0 0.0
    %568 = vmatprep.subr.mxu0 0.0
    %569 = vmatpush1.msra.mxu0 0.0
    %570 = vmatprep.subr.mxu0 0.0
    %571 = vmatpush1.msra.mxu0 0.0
    %572 = vmatprep.subr.mxu0 0.0
    %573 = vmatpush1.msra.mxu0 0.0
    %574 = vmatprep.subr.mxu0 0.0
    %575 = vmatpush1.msra.mxu0 0.0
    %576 = vmatprep.subr.mxu0 0.0
    %577 = vmatpush1.msra.mxu0 0.0
    %578 = vmatprep.subr.mxu0 0.0
    %579 = vmatpush1.msra.mxu0 0.0
    %580 = vmatprep.subr.mxu0 0.0
    %581 = vmatpush1.msra.mxu0 0.0
    %582 = vmatprep.subr.mxu0 0.0
    %583 = vmatpush1.msra.mxu0 0.0
    %584 = vmatprep.subr.mxu0 0.0
    %585 = vmatpush1.msra.mxu0 0.0
    %586 = vmatprep.subr.mxu0 0.0
    %587 = vmatpush1.msra.mxu0 0.0
    %588 = vmatprep.subr.mxu0 0.0
    %589 = vmatpush1.msra.mxu0 0.0
    %590 = vmatprep.subr.mxu0 0.0
    %591 = vmatpush1.msra.mxu0 0.0
    %592 = vmatprep.subr.mxu0 0.0
    %593 = vmatpush1.msra.mxu0 0.0
    %594 = vmatprep.subr.mxu0 0.0
    %595 = vmatpush1.msra.mxu0 0.0
    %596 = vmatprep.subr.mxu0 0.0
    %597 = vmatpush1.msra.mxu0 0.0
    %598 = vmatprep.mubr.f32.mxu0 0.0
    %599 = vmatmul.mubr.f32.gmra.mrb[0].mxu0 %v372
    %v600 = vpop.f32.mrb[0].mxu0
    %v601 = vadd.f32 0.0, %v600
    %v602 = vpop.f32.mrb[0].mxu0
    %603 = vdwg.mxu0
    %v605 = vsel %vm446, %v444, 0
    %607 = vmatprep.subr.mxu0 0.0
    %608 = vmatpush1.msra.mxu0 %v455
    %609 = vmatprep.subr.mxu0 0.0
    %610 = vmatpush1.msra.mxu0 0.0
    %611 = vmatprep.subr.mxu0 0.0
    %612 = vmatpush1.msra.mxu0 0.0
    %613 = vmatprep.subr.mxu0 0.0
    %614 = vmatpush1.msra.mxu0 0.0
    %615 = vmatprep.subr.mxu0 0.0
    %616 = vmatpush1.msra.mxu0 0.0
    %617 = vmatprep.subr.mxu0 0.0
    %618 = vmatpush1.msra.mxu0 0.0
    %619 = vmatprep.subr.mxu0 0.0
    %620 = vmatpush1.msra.mxu0 0.0
    %621 = vmatprep.subr.mxu0 0.0
    %622 = vmatpush1.msra.mxu0 0.0
    %623 = vmatprep.subr.mxu0 0.0
    %624 = vmatpush1.msra.mxu0 0.0
    %625 = vmatprep.subr.mxu0 0.0
    %626 = vmatpush1.msra.mxu0 0.0
    %627 = vmatprep.subr.mxu0 0.0
    %628 = vmatpush1.msra.mxu0 0.0
    %629 = vmatprep.subr.mxu0 0.0
    %630 = vmatpush1.msra.mxu0 0.0
    %631 = vmatprep.subr.mxu0 0.0
    %632 = vmatpush1.msra.mxu0 0.0
    %633 = vmatprep.subr.mxu0 0.0
    %634 = vmatpush1.msra.mxu0 0.0
    %635 = vmatprep.subr.mxu0 0.0
    %636 = vmatpush1.msra.mxu0 0.0
    %637 = vmatprep.subr.mxu0 0.0
    %638 = vmatpush1.msra.mxu0 0.0
    %639 = vmatprep.subr.mxu0 0.0
    %640 = vmatpush1.msra.mxu0 0.0
    %641 = vmatprep.subr.mxu0 0.0
    %642 = vmatpush1.msra.mxu0 0.0
    %643 = vmatprep.subr.mxu0 0.0
    %644 = vmatpush1.msra.mxu0 0.0
    %645 = vmatprep.subr.mxu0 0.0
    %646 = vmatpush1.msra.mxu0 0.0
    %647 = vmatprep.subr.mxu0 0.0
    %648 = vmatpush1.msra.mxu0 0.0
    %649 = vmatprep.subr.mxu0 0.0
    %650 = vmatpush1.msra.mxu0 0.0
    %651 = vmatprep.subr.mxu0 0.0
    %652 = vmatpush1.msra.mxu0 0.0
    %653 = vmatprep.subr.mxu0 0.0
    %654 = vmatpush1.msra.mxu0 0.0
    %655 = vmatprep.subr.mxu0 0.0
    %656 = vmatpush1.msra.mxu0 0.0
    %657 = vmatprep.subr.mxu0 0.0
    %658 = vmatpush1.msra.mxu0 0.0
    %659 = vmatprep.subr.mxu0 0.0
    %660 = vmatpush1.msra.mxu0 0.0
    %661 = vmatprep.subr.mxu0 0.0
    %662 = vmatpush1.msra.mxu0 0.0
    %663 = vmatprep.subr.mxu0 0.0
    %664 = vmatpush1.msra.mxu0 0.0
    %665 = vmatprep.subr.mxu0 0.0
    %666 = vmatpush1.msra.mxu0 0.0
    %667 = vmatprep.subr.mxu0 0.0
    %668 = vmatpush1.msra.mxu0 0.0
    %669 = vmatprep.subr.mxu0 0.0
    %670 = vmatpush1.msra.mxu0 0.0
    %671 = vmatprep.mubr.f32.mxu0 0.0
    %672 = vmatmul.mubr.f32.gmra.mrb[0].mxu0 %v605
    %v673 = vpop.f32.mrb[0].mxu0
    %v674 = vadd.f32 0.0, %v673
    %v675 = vpop.f32.mrb[0].mxu0
    %676 = vdwg.mxu0
    %v677 = vmul.f32 %v601, %v674
    %v678 = vld [vmem:[%s6] sm:$0xff]
    %v679 = vld [vmem:[%s6 + $0x8] sm:$0xff]
    %v680 = vld [vmem:[%s6 + $0x10] sm:$0xff]
    %v681 = vld [vmem:[%s6 + $0x18] sm:$0xff]
    %v682 = vld [vmem:[%s7] sm:$0x1]
    %v684 = vlaneseq
    %v685 = vshrl.u32 %v684, 7
    %v686 = vsub.s32 0, %v685
    %v687 = vrot.slane %v682, %v686
    %v690 = vsel %vm86, %v677, 0
    %692 = vmatprep.subr.mxu0 0.0
    %693 = vmatpush1.msra.mxu0 %v678
    %694 = vmatprep.subr.mxu0 0.0
    %695 = vmatpush1.msra.mxu0 %v679
    %696 = vmatprep.subr.mxu0 0.0
    %697 = vmatpush1.msra.mxu0 %v680
    %698 = vmatprep.subr.mxu0 0.0
    %699 = vmatpush1.msra.mxu0 %v681
    %700 = vmatprep.subr.mxu0 0.0
    %701 = vmatpush1.msra.mxu0 0.0
    %702 = vmatprep.subr.mxu0 0.0
    %703 = vmatpush1.msra.mxu0 0.0
    %704 = vmatprep.subr.mxu0 0.0
    %705 = vmatpush1.msra.mxu0 0.0
    %706 = vmatprep.subr.mxu0 0.0
    %707 = vmatpush1.msra.mxu0 0.0
    %708 = vmatprep.subr.mxu0 0.0
    %709 = vmatpush1.msra.mxu0 0.0
    %710 = vmatprep.subr.mxu0 0.0
    %711 = vmatpush1.msra.mxu0 0.0
    %712 = vmatprep.subr.mxu0 0.0
    %713 = vmatpush1.msra.mxu0 0.0
    %714 = vmatprep.subr.mxu0 0.0
    %715 = vmatpush1.msra.mxu0 0.0
    %716 = vmatprep.subr.mxu0 0.0
    %717 = vmatpush1.msra.mxu0 0.0
    %718 = vmatprep.subr.mxu0 0.0
    %719 = vmatpush1.msra.mxu0 0.0
    %720 = vmatprep.subr.mxu0 0.0
    %721 = vmatpush1.msra.mxu0 0.0
    %722 = vmatprep.subr.mxu0 0.0
    %723 = vmatpush1.msra.mxu0 0.0
    %724 = vmatprep.subr.mxu0 0.0
    %725 = vmatpush1.msra.mxu0 0.0
    %726 = vmatprep.subr.mxu0 0.0
    %727 = vmatpush1.msra.mxu0 0.0
    %728 = vmatprep.subr.mxu0 0.0
    %729 = vmatpush1.msra.mxu0 0.0
    %730 = vmatprep.subr.mxu0 0.0
    %731 = vmatpush1.msra.mxu0 0.0
    %732 = vmatprep.subr.mxu0 0.0
    %733 = vmatpush1.msra.mxu0 0.0
    %734 = vmatprep.subr.mxu0 0.0
    %735 = vmatpush1.msra.mxu0 0.0
    %736 = vmatprep.subr.mxu0 0.0
    %737 = vmatpush1.msra.mxu0 0.0
    %738 = vmatprep.subr.mxu0 0.0
    %739 = vmatpush1.msra.mxu0 0.0
    %740 = vmatprep.subr.mxu0 0.0
    %741 = vmatpush1.msra.mxu0 0.0
    %742 = vmatprep.subr.mxu0 0.0
    %743 = vmatpush1.msra.mxu0 0.0
    %744 = vmatprep.subr.mxu0 0.0
    %745 = vmatpush1.msra.mxu0 0.0
    %746 = vmatprep.subr.mxu0 0.0
    %747 = vmatpush1.msra.mxu0 0.0
    %748 = vmatprep.subr.mxu0 0.0
    %749 = vmatpush1.msra.mxu0 0.0
    %750 = vmatprep.subr.mxu0 0.0
    %751 = vmatpush1.msra.mxu0 0.0
    %752 = vmatprep.subr.mxu0 0.0
    %753 = vmatpush1.msra.mxu0 0.0
    %754 = vmatprep.subr.mxu0 0.0
    %755 = vmatpush1.msra.mxu0 0.0
    %756 = vmatprep.mubr.f32.mxu0 0.0
    %757 = vmatmul.mubr.f32.gmra.mrb[0].mxu0 %v690
    %v758 = vpop.f32.mrb[0].mxu0
    %v759 = vadd.f32 %v687, %v758
    %v760 = vpop.f32.mrb[0].mxu0
    %761 = vdwg.mxu0
    %vm762 = vcmask 254976
    %763 = vst.msk [vmem:[#allocation8] sm:$0x3] %vm762, %v759
    // Predicated region
    $region54: #{tpu_custom_call.1} parent=1 // pred_check
      _
    $region55: #{tpu_custom_call.1} parent=1 // pred_check_branch
      %765 = sbr.rel (0) target = $region57
    $region56: #{tpu_custom_call.1} parent=1 // pred_region
      %s767 = ssub.s32 32, 32
      %768 = vsyncadd [#allocation4], %s767
      %s770 = sshll.u32 [#allocation8], 4
      %s771 = int_to_ptr.vmem [resolvable:$true] %s770
      %773 = dma.vmem_to_hbm [thread:$0]  %s771, 32, %s10, [#allocation4]
    $region57: #{tpu_custom_call.1} parent=1 // pred_fallthru
      _
    // Predicated region
    $region58: #{tpu_custom_call.1} parent=1 // pred_check
      _
    $region59: #{tpu_custom_call.1} parent=1 // pred_check_branch
      %775 = sbr.rel (0) target = $region61
    $region60: #{tpu_custom_call.1} parent=1 // pred_region
      %776 = dma.done [#allocation4], 32
    $region61: #{tpu_custom_call.1} parent=1 // pred_fallthru
      _
    %777 = vsyncpa [#allocation3], 1
    %778 = vsyncpa [#allocation6], 1
    %779 = vsyncpa [#allocation4], 1

</llo_original>
